<compile_context>
chip_gen: v7x
topology: tpu7x:2x2x1
jax: 0.10.0
libtpu: 0.0.40
codegen_flags: <defaults>
</compile_context>

<pallas_src>
import functools

import numpy as np
import jax
import jax.numpy as jnp
from jax.experimental import pallas as pl
from jax.experimental.pallas import tpu as pltpu


_BN_EPS = 1e-5


def _round_up(x, m):
    return (x + m - 1) // m * m


# --------------------------- chip-generation knobs ---------------------------

def _detect_tpu():
    """Return (generation, physical VMEM bytes) with safe fallbacks."""
    gen = 0
    try:
        kind = jax.devices()[0].device_kind
        gen = next((int(ch) for ch in kind if ch.isdigit()), 0)
    except Exception:
        pass
    vmem = None
    try:
        vmem = int(pltpu.get_tpu_info().vmem_capacity_bytes)
    except Exception:
        pass
    if vmem is None:
        # v4/v5e/v6e have 128 MiB VMEM; v7x (and unknown parts) treated as 64 MiB.
        vmem = 128 * 1024 * 1024 if gen in (4, 5, 6) else 64 * 1024 * 1024
    return gen, vmem


_TPU_GEN, _VMEM_PHYS = _detect_tpu()
# Scoped-VMEM budget: generous on 128-MiB parts, conservative on 64-MiB v7x.
_VMEM_LIMIT = min(int(_VMEM_PHYS * 3 // 4), 96 * 1024 * 1024)
_CONV3_VMEM_BUDGET = int(_VMEM_LIMIT * 0.7)
# Splitting a single-block grid into two tn=128 blocks only pays off on dual-TC chips.
_DUAL_TC = _TPU_GEN >= 7


def _compiler_params(sem):
    return pltpu.CompilerParams(dimension_semantics=sem,
                                vmem_limit_bytes=_VMEM_LIMIT)


def _pick_tk(kp):
    """Largest multiple of 128 that divides kp and is <= 512 (fewest K steps)."""
    for cand in (512, 448, 384, 320, 256, 192, 128):
        if kp % cand == 0:
            return cand
    return 128


# --------------------------- Pallas matmul kernel ----------------------------
# out = A @ B + bias (+ residual) (+ ReLU); bf16 operands, f32 accumulator/epilogue.

def _mm_kernel(*refs, relu, has_res, single_k):
    a_ref, b_ref, bias_ref = refs[:3]
    res_ref = refs[3] if has_res else None
    o_ref = refs[3 + int(has_res)]
    acc_ref = None if single_k else refs[4 + int(has_res)]

    def _finish(acc):
        out = acc + bias_ref[...]                              # f32 epilogue
        if res_ref is not None:
            out = out + res_ref[...].astype(jnp.float32)       # fused residual add
        if relu:
            out = jnp.maximum(out, 0.0)
        o_ref[...] = out.astype(o_ref.dtype)

    if single_k:
        # Single reduction step: no scratch accumulator, no init/finalize RMW passes.
        _finish(jnp.dot(a_ref[...], b_ref[...], preferred_element_type=jnp.float32))
    else:
        @pl.when(pl.program_id(2) == 0)
        def _():
            acc_ref[...] = jnp.zeros_like(acc_ref)

        acc_ref[...] += jnp.dot(a_ref[...], b_ref[...],
                                preferred_element_type=jnp.float32)

        @pl.when(pl.program_id(2) == pl.num_programs(2) - 1)
        def _():
            _finish(acc_ref[...])


def matmul_bias_act(a, b, bias, residual=None, relu=False):
    """(M,K)@(K,N) + bias (+residual) (+ReLU) on the MXU.  bf16 tiles, f32 acc."""
    M, K = a.shape
    N = b.shape[1]
    a = a.astype(jnp.bfloat16)
    b = b.astype(jnp.bfloat16)
    bias = bias.astype(jnp.float32).reshape(1, N)

    # Adaptive tiles: never pad tiny-M (deep) layers up to 128/256 rows of zeros.
    tm = min(256, _round_up(M, 8))
    Mp = _round_up(M, tm)
    if K <= 512 and K % 8 == 0:
        Kp, tk = K, K                       # single K step, no padding
    else:
        Kp = _round_up(K, 128)
        tk = _pick_tk(Kp)
    Np = _round_up(N, 128)
    tn = min(Np, 256 if Np % 256 == 0 else 128)
    if _DUAL_TC and Mp == tm and Np == tn and Np >= 256:
        tn = 128                            # >=2 parallel blocks only on dual-TC v7x
    single_k = Kp == tk

    # Pads are no-ops for tile-aligned shapes (almost every conv in this network).
    if (M, K) != (Mp, Kp):
        a = jnp.pad(a, ((0, Mp - M), (0, Kp - K)))
    if (K, N) != (Kp, Np):
        b = jnp.pad(b, ((0, Kp - K), (0, Np - N)))
    if N != Np:
        bias = jnp.pad(bias, ((0, 0), (0, Np - N)))

    inputs = [a, b, bias]
    in_specs = [pl.BlockSpec((tm, tk), lambda i, j, k: (i, k)),
                pl.BlockSpec((tk, tn), lambda i, j, k: (k, j)),
                pl.BlockSpec((1, tn), lambda i, j, k: (0, j))]
    has_res = residual is not None
    res_bytes = 0
    if has_res:
        r = residual.astype(jnp.bfloat16)
        if (M, N) != (Mp, Np):
            r = jnp.pad(r, ((0, Mp - M), (0, Np - N)))
        inputs.append(r)
        in_specs.append(pl.BlockSpec((tm, tn), lambda i, j, k: (i, j)))
        res_bytes = Mp * Np * 2

    cost = pl.CostEstimate(
        flops=2 * Mp * Kp * Np, transcendentals=0,
        bytes_accessed=(Mp * Kp + Kp * Np + Mp * Np) * 2 + Np * 4 + res_bytes)

    out = pl.pallas_call(
        functools.partial(_mm_kernel, relu=relu, has_res=has_res, single_k=single_k),
        out_shape=jax.ShapeDtypeStruct((Mp, Np), jnp.bfloat16),
        grid_spec=pltpu.PrefetchScalarGridSpec(
            num_scalar_prefetch=0,
            grid=(Mp // tm, Np // tn, Kp // tk),
            in_specs=in_specs,
            out_specs=pl.BlockSpec((tm, tn), lambda i, j, k: (i, j)),
            scratch_shapes=[] if single_k else [pltpu.VMEM((tm, tn), jnp.float32)]),
        compiler_params=_compiler_params(("parallel", "parallel", "arbitrary")),
        cost_estimate=cost,
    )(*inputs)
    if (M, N) != (Mp, Np):
        out = out[:M, :N]
    return out


# ---------------------- fused 3x3 stride-1 conv kernel -----------------------
# The padded image is flattened to (lflat, Cin) with an 8-aligned row pitch Wp; tap
# (di, dj) of the 3x3 window is the slab shifted by di*Wp + dj rows, so all 9 taps
# are built from ONE HBM read.  Outputs are computed on the padded-width grid
# (Mq = H*Wp rows); the garbage columns per row are sliced off outside the kernel.

def _conv3x3_kernel(x_ref, w_ref, bias_ref, o_ref, stage_ref, *, Wp, Mq, relu):
    # Wp % 8 == 0 -> the di*Wp row shifts are sublane-aligned.  The dj = 1, 2 column
    # shifts are staged ONCE each through VMEM scratch so every MXU operand slice is
    # aligned (no per-tap relayout copies).  Single cin step -> accumulate in a local
    # f32 value and write o_ref once (no scratch accumulator RMW).
    stage_rows = stage_ref.shape[0]
    acc = None
    for dj in range(3):
        if dj:
            stage_ref[...] = x_ref[0, dj:dj + stage_rows, :]
        for di in range(3):
            off = di * Wp
            if dj == 0:
                a = x_ref[0, off:off + Mq, :]
            else:
                a = stage_ref[off:off + Mq, :]
            contrib = jnp.dot(a, w_ref[di * 3 + dj],
                              preferred_element_type=jnp.float32)
            acc = contrib if acc is None else acc + contrib
    out = acc + bias_ref[...]
    if relu:
        out = jnp.maximum(out, 0.0)
    o_ref[0] = out.astype(o_ref.dtype)


def _conv3x3_fits(h, wd, cin, cout):
    """Fused-path guard: single cin step only, plus a conservative VMEM estimate."""
    if cin > 512:
        return False
    wp = _round_up(wd + 2, 8)
    lflat = (h + 3) * wp
    mq = h * wp
    stage_rows = (h + 2) * wp
    coutp = max(_round_up(cout, 128), 128)
    tn = 128 if coutp == 128 else (256 if coutp % 256 == 0 else 128)
    vmem = (2 * lflat * cin * 2        # double-buffered bf16 input slab
            + stage_rows * cin * 2     # per-dj staging scratch
            + 2 * 9 * cin * tn * 2     # double-buffered bf16 weights
            + 2 * mq * tn * 4          # f32 accumulator + dot temporary
            + 2 * mq * tn * 2)         # double-buffered bf16 output
    return vmem <= _CONV3_VMEM_BUDGET


@functools.partial(jax.jit, static_argnames=("relu",))
def _conv3x3_s1(x, w, bias, *, relu=False):
    n, h, wd, cin = x.shape
    cout = w.shape[-1]
    x = x.astype(jnp.bfloat16)
    w9 = w.reshape(9, cin, cout).astype(jnp.bfloat16)

    wp = _round_up(wd + 2, 8)     # padded width / row pitch, 8-sublane aligned
    mq = h * wp                   # output rows per image (padded-width grid)
    lflat = (h + 3) * wp          # 1 top + 2 bottom pad rows cover all tap reads
    stage_rows = (h + 2) * wp     # rows needed by the per-dj staging copy

    # Zero pad: 1 top, 2 bottom, 1 left, (wp - wd - 1) right; flatten spatial rows.
    # Garbage columns (ow >= wd) wrap across rows but are sliced off below.
    xp = jnp.pad(x, ((0, 0), (1, 2), (1, wp - wd - 1), (0, 0)))
    xf = xp.reshape(n, lflat, cin)

    # Lane-dense output: pad cout up to >=128 so stores are full-lane vst; slice after.
    coutp = max(_round_up(cout, 128), 128)
    tn = 128 if coutp == 128 else (256 if coutp % 256 == 0 else 128)
    bias_p = bias.astype(jnp.float32).reshape(1, cout)
    if coutp != cout:
        w9 = jnp.pad(w9, ((0, 0), (0, 0), (0, coutp - cout)))
        bias_p = jnp.pad(bias_p, ((0, 0), (0, coutp - cout)))

    cost = pl.CostEstimate(
        flops=2 * 9 * n * mq * cin * coutp,
        transcendentals=0,
        bytes_accessed=(xf.size + w9.size + n * mq * coutp) * 2)

    out = pl.pallas_call(
        functools.partial(_conv3x3_kernel, Wp=wp, Mq=mq, relu=relu),
        out_shape=jax.ShapeDtypeStruct((n, mq, coutp), jnp.bfloat16),
        grid_spec=pltpu.PrefetchScalarGridSpec(
            num_scalar_prefetch=0,
            grid=(n, coutp // tn),
            in_specs=[pl.BlockSpec((1, lflat, cin), lambda b, j: (b, 0, 0)),
                      pl.BlockSpec((9, cin, tn), lambda b, j: (0, 0, j)),
                      pl.BlockSpec((1, tn), lambda b, j: (0, j))],
            out_specs=pl.BlockSpec((1, mq, tn), lambda b, j: (b, 0, j)),
            scratch_shapes=[pltpu.VMEM((stage_rows, cin), jnp.bfloat16)]),
        compiler_params=_compiler_params(("parallel", "parallel")),
        cost_estimate=cost,
    )(xf, w9, bias_p)

    return out.reshape(n, h, wp, coutp)[:, :, :wd, :cout]


# ------------------------------ conv dispatch --------------------------------

def _im2col(x, kh, kw, stride, pad):
    if pad:
        x = jnp.pad(x, ((0, 0), (pad, pad), (pad, pad), (0, 0)))
    N, H, W, C = x.shape
    Ho = (H - kh) // stride + 1
    Wo = (W - kw) // stride + 1
    cols = []
    for i in range(kh):
        for j in range(kw):
            cols.append(x[:, i:i + stride * (Ho - 1) + 1:stride,
                            j:j + stride * (Wo - 1) + 1:stride, :])
    return jnp.concatenate(cols, axis=-1), Ho, Wo


@functools.partial(jax.jit, static_argnames=("stride", "relu"))
def _conv1x1(x, w, bias, residual=None, *, stride=1, relu=False):
    cin, cout = w.shape[2], w.shape[3]
    if stride != 1:
        x = x[:, ::stride, ::stride, :]
    n, h, wd, _ = x.shape
    a = x.reshape(n * h * wd, cin)
    res = residual.reshape(n * h * wd, cout) if residual is not None else None
    out = matmul_bias_act(a, w.reshape(cin, cout), bias, residual=res, relu=relu)
    return out.reshape(n, h, wd, cout)


@functools.partial(jax.jit, static_argnames=("stride", "padding", "relu"))
def _conv_im2col(x, w, bias, *, stride=1, padding=0, relu=False):
    # TODO(synk): only the 7x7 stem and the three stride-2 3x3 convs take this path;
    # they still build (small) im2col patches in HBM before the Pallas matmul.
    kh, kw, cin, cout = w.shape
    patches, ho, wo = _im2col(x.astype(jnp.bfloat16), kh, kw, stride, padding)
    n = x.shape[0]
    a = patches.reshape(n * ho * wo, kh * kw * cin)
    out = matmul_bias_act(a, w.reshape(kh * kw * cin, cout), bias, relu=relu)
    return out.reshape(n, ho, wo, cout)


def conv2d(x, w, bias, stride=1, padding=0, relu=False, residual=None):
    kh, kw, cin, cout = w.shape
    if kh == 1 and kw == 1:
        return _conv1x1(x, w, bias, residual, stride=stride, relu=relu)
    if (kh == 3 and kw == 3 and stride == 1 and padding == 1 and residual is None
            and _conv3x3_fits(x.shape[1], x.shape[2], cin, cout)):
        return _conv3x3_s1(x, w, bias, relu=relu)
    assert residual is None
    return _conv_im2col(x, w, bias, stride=stride, padding=padding, relu=relu)


# ------------------------------- JAX glue ops --------------------------------

def maxpool_3x3_s2_p1(x):
    # TODO(synk): 3x3/s2 max-pool kept as plain-JAX glue (tiny, memory-bound).
    x = jnp.pad(x, ((0, 0), (1, 1), (1, 1), (0, 0)), constant_values=-jnp.inf)
    N, H, W, C = x.shape
    Ho = (H - 3) // 2 + 1
    Wo = (W - 3) // 2 + 1
    out = None
    for i in range(3):
        for j in range(3):
            s = x[:, i:i + 2 * (Ho - 1) + 1:2, j:j + 2 * (Wo - 1) + 1:2, :]
            out = s if out is None else jnp.maximum(out, s)
    return out


def _interp_matrix(out_n, in_n):
    """Dense 1-D bilinear interpolation matrix (align_corners=True), f32 numpy."""
    if out_n == 1 or in_n == 1:
        src = np.zeros((out_n,), np.float32)
    else:
        src = np.arange(out_n, dtype=np.float32) * ((in_n - 1) / (out_n - 1))
    lo = np.clip(np.floor(src).astype(np.int64), 0, in_n - 1)
    hi = np.minimum(lo + 1, in_n - 1)
    frac = (src - lo.astype(np.float32)).astype(np.float32)
    R = np.zeros((out_n, in_n), np.float32)
    np.add.at(R, (np.arange(out_n), lo), 1.0 - frac)
    np.add.at(R, (np.arange(out_n), hi), frac)
    return R


@functools.partial(jax.jit, static_argnames=("out_h", "out_w"))
def bilinear_resize(x, out_h, out_w):
    """F.interpolate(mode='bilinear', align_corners=True) as two separable matmuls
    (out = R_h @ x @ R_w^T), bf16 operands / f32 accumulation on the MXU — no gathers,
    no f32 HBM round trip."""
    n, h, w, c = x.shape
    if (h, w) == (out_h, out_w):
        return x
    rh = jnp.asarray(_interp_matrix(out_h, h), jnp.bfloat16)
    rw = jnp.asarray(_interp_matrix(out_w, w), jnp.bfloat16)
    xb = x.astype(jnp.bfloat16)
    y = jnp.einsum("oh,nhwc->nowc", rh, xb, preferred_element_type=jnp.float32)
    y = jnp.einsum("pw,nowc->nopc", rw, y.astype(jnp.bfloat16),
                   preferred_element_type=jnp.float32)
    return y.astype(x.dtype)


# ------------------------------- parameters ----------------------------------

def _conv_weight(key, kh, kw, cin, cout):
    std = 1.0 / np.sqrt(kh * kw * cin)
    return jax.random.normal(key, (kh, kw, cin, cout), jnp.float32) * std


def _fold_bn(w):
    # BatchNorm (eval mode): gamma=1, beta=0, mean=0, var=1 folded into the conv.
    cout = w.shape[-1]
    scale = np.float32(1.0 / np.sqrt(1.0 + _BN_EPS))
    return (w * scale).astype(jnp.bfloat16), jnp.zeros((cout,), jnp.float32)


def _make_bottleneck_params(keyit, inplanes, planes, stride):
    p = {"stride": stride}
    p["conv1"] = _fold_bn(_conv_weight(next(keyit), 1, 1, inplanes, planes))
    p["conv2"] = _fold_bn(_conv_weight(next(keyit), 3, 3, planes, planes))
    p["conv3"] = _fold_bn(_conv_weight(next(keyit), 1, 1, planes, planes * 4))
    if stride != 1 or inplanes != planes * 4:
        p["down"] = _fold_bn(_conv_weight(next(keyit), 1, 1, inplanes, planes * 4))
    return p


def _make_layer_params(keyit, inplanes, planes, blocks, stride):
    params = []
    for bi in range(blocks):
        s = stride if bi == 0 else 1
        params.append(_make_bottleneck_params(keyit, inplanes, planes, s))
        inplanes = planes * 4
    return params, inplanes


def make_fpn_params(seed=0, out_channels=2):
    keys = iter(jax.random.split(jax.random.PRNGKey(seed), 256))
    P = {}
    # resnet101 backbone: conv1/bn1 + layers [3, 4, 23, 3] of Bottleneck blocks.
    P["stem"] = _fold_bn(_conv_weight(next(keys), 7, 7, 3, 64))
    inplanes = 64
    P["layer1"], inplanes = _make_layer_params(keys, inplanes, 64, 3, 1)
    P["layer2"], inplanes = _make_layer_params(keys, inplanes, 128, 4, 2)
    P["layer3"], inplanes = _make_layer_params(keys, inplanes, 256, 23, 2)
    P["layer4"], inplanes = _make_layer_params(keys, inplanes, 512, 3, 2)

    def head(kh, cin, cout):
        return (_conv_weight(next(keys), kh, kh, cin, cout).astype(jnp.bfloat16),
                jnp.zeros((cout,), jnp.float32))

    P["toplayer"] = head(1, 2048, 256)
    P["smooth1"] = head(3, 256, 256)
    P["smooth2"] = head(3, 256, 256)
    P["smooth3"] = head(3, 256, 256)
    P["latlayer1"] = head(1, 1024, 256)
    P["latlayer2"] = head(1, 512, 256)
    P["latlayer3"] = head(1, 256, 256)
    P["finalconv1"] = head(3, 256, 32)
    P["finalconv2"] = head(3, 32, 32)
    P["finalconv3"] = head(3, 32, out_channels)
    return P


# ------------------------------- forward pass --------------------------------

def _bottleneck(x, p):
    out = conv2d(x, *p["conv1"], relu=True)
    out = conv2d(out, *p["conv2"], stride=p["stride"], padding=1, relu=True)
    if "down" in p:
        identity = conv2d(x, *p["down"], stride=p["stride"], relu=False)
    else:
        identity = x
    # residual add + ReLU fused into the conv3 matmul epilogue
    return conv2d(out, *p["conv3"], relu=True, residual=identity)


def _run_layer(x, layer_params):
    for p in layer_params:
        x = _bottleneck(x, p)
    return x


def _upsample_add(x_top, c_lat, lat_params):
    # latlayer(c) + bilinear_upsample(x): the add is fused into the 1x1-conv epilogue.
    w, b = lat_params
    up = bilinear_resize(x_top, out_h=c_lat.shape[1], out_w=c_lat.shape[2])
    return conv2d(c_lat, w, b, residual=up)


def fpn_forward(x_nchw, P):
    x = jnp.transpose(x_nchw, (0, 2, 3, 1)).astype(jnp.bfloat16)   # NCHW -> NHWC
    c1 = conv2d(x, *P["stem"], stride=2, padding=3, relu=True)     # conv1+bn1+relu
    c1 = maxpool_3x3_s2_p1(c1)
    c2 = _run_layer(c1, P["layer1"])
    c3 = _run_layer(c2, P["layer2"])
    c4 = _run_layer(c3, P["layer3"])
    c5 = _run_layer(c4, P["layer4"])
    p5 = conv2d(c5, *P["toplayer"])
    p4 = _upsample_add(p5, c4, P["latlayer1"])
    p3 = _upsample_add(p4, c3, P["latlayer2"])
    p2 = _upsample_add(p3, c2, P["latlayer3"])
    p4 = conv2d(p4, *P["smooth1"], padding=1)
    p3 = conv2d(p3, *P["smooth2"], padding=1)
    p2 = conv2d(p2, *P["smooth3"], padding=1)
    H1, W1 = x.shape[1], x.shape[2]
    upsam = bilinear_resize(p2, out_h=H1, out_w=W1)
    f2 = conv2d(upsam, *P["finalconv1"], padding=1, relu=True)
    feature = conv2d(f2, *P["finalconv2"], padding=1)
    ans = conv2d(feature, *P["finalconv3"], padding=1)
    # return NCHW, f32 like the PyTorch module
    return (jnp.transpose(feature.astype(jnp.float32), (0, 3, 1, 2)),
            jnp.transpose(ans.astype(jnp.float32), (0, 3, 1, 2)))


if __name__ == "__main__":
    params = make_fpn_params(seed=0, out_channels=2)
    x = jax.random.normal(jax.random.PRNGKey(0), (2, 3, 64, 64), jnp.float32)  # NCHW
    feature, ans = fpn_forward(x, params)
    feature, ans = jax.block_until_ready((feature, ans))
    assert feature.shape == (2, 32, 64, 64), feature.shape
    assert ans.shape == (2, 2, 64, 64), ans.shape
    assert bool(jnp.isfinite(feature).all()) and bool(jnp.isfinite(ans).all())
    print("KERNEL_OK")
</pallas_src>

<mosaic_0001>
module attributes {stable_mosaic.version = 11 : i64} {
  func.func @_mm_kernel(%arg0: i32, %arg1: i32, %arg2: i32, %arg3: memref<256x256xbf16, #tpu.memory_space<vmem>>, %arg4: memref<256x128xbf16, #tpu.memory_space<vmem>>, %arg5: memref<1x128xf32, #tpu.memory_space<vmem>>, %arg6: memref<256x128xbf16, #tpu.memory_space<vmem>>) attributes {dimension_semantics = [#tpu.dimension_semantics<parallel>, #tpu.dimension_semantics<parallel>, #tpu.dimension_semantics<arbitrary>], iteration_bounds = array<i64: 8, 1, 1>, scalar_prefetch = 0 : i64, scratch_operands = 0 : i64, tpu.core_type = #tpu.core_type<tc>, window_params = [{transform_indices = @transform_0, window_bounds = array<i64: 256, 256>}, {transform_indices = @transform_1, window_bounds = array<i64: 256, 128>}, {transform_indices = @transform_2, window_bounds = array<i64: 1, 128>}, {transform_indices = @transform_3, window_bounds = array<i64: 256, 128>}]} {
    %c0 = arith.constant 0 : index
    %c0_0 = arith.constant 0 : index
    %0 = vector.load %arg3[%c0, %c0_0] : memref<256x256xbf16, #tpu.memory_space<vmem>>, vector<256x256xbf16>
    %c0_1 = arith.constant 0 : index
    %c0_2 = arith.constant 0 : index
    %1 = vector.load %arg4[%c0_1, %c0_2] : memref<256x128xbf16, #tpu.memory_space<vmem>>, vector<256x128xbf16>
    %cst = arith.constant dense<0.000000e+00> : vector<256x128xf32>
    %2 = tpu.matmul %0, %1, %cst {dimension_numbers = #tpu.dot_dimension_numbers<[1], [0], [0], [1], [0, 0, 1, 1], [], []>} : vector<256x256xbf16>, vector<256x128xbf16>, vector<256x128xf32> -> vector<256x128xf32>
    %c0_3 = arith.constant 0 : index
    %c0_4 = arith.constant 0 : index
    %3 = vector.load %arg5[%c0_3, %c0_4] : memref<1x128xf32, #tpu.memory_space<vmem>>, vector<1x128xf32>
    %4 = vector.broadcast %3 : vector<1x128xf32> to vector<256x128xf32>
    %5 = arith.addf %2, %4 : vector<256x128xf32>
    %cst_5 = arith.constant 0.000000e+00 : f32
    %6 = vector.broadcast %cst_5 : f32 to vector<256x128xf32>
    %7 = arith.maximumf %5, %6 : vector<256x128xf32>
    %8 = arith.truncf %7 : vector<256x128xf32> to vector<256x128xbf16>
    %c0_6 = arith.constant 0 : index
    %c0_7 = arith.constant 0 : index
    %9 = vector.load %arg6[%c0_6, %c0_7] : memref<256x128xbf16, #tpu.memory_space<vmem>>, vector<256x128xbf16>
    tpu.vector_store %arg6[%c0_6, %c0_7], %8 {strides = array<i32>} : memref<256x128xbf16, #tpu.memory_space<vmem>>, vector<256x128xbf16>,
    return
  }
  func.func @transform_0(%arg0: i32, %arg1: i32, %arg2: i32) -> (i32, i32) {
    %c0_i32 = arith.constant 0 : i32
    return %arg0, %arg2 : i32, i32
  }
  func.func @transform_1(%arg0: i32, %arg1: i32, %arg2: i32) -> (i32, i32) {
    %c0_i32 = arith.constant 0 : i32
    return %arg2, %arg1 : i32, i32
  }
  func.func @transform_2(%arg0: i32, %arg1: i32, %arg2: i32) -> (i32, i32) {
    %c0_i32 = arith.constant 0 : i32
    %c0_i32_0 = arith.constant 0 : i32
    return %c0_i32, %arg1 : i32, i32
  }
  func.func @transform_3(%arg0: i32, %arg1: i32, %arg2: i32) -> (i32, i32) {
    %c0_i32 = arith.constant 0 : i32
    return %arg0, %arg1 : i32, i32
  }
}

</mosaic_0001>

<llo_original>
// kernel: _conv_im2col.1
$region0: #{_conv_im2col.1}
  #allocation0 [shape = 'u32[]', space=smem, size = 0x4, offset = 0x4, fixed_abs, tag = 'smem constant byte address 0x4 - core index']
  #allocation1 [shape = 'u32[144,128]{1,0:T(1,128)}', space=vmem, size = 0x12000, scoped, tag = 'internal scratch']
  %s0 = inlined_call_operand.vmem [shape: bf16[2048,256], index: 0, kind: input, shape index: {}]
  %s1 = inlined_call_operand.vmem [shape: bf16[256,128], index: 1, kind: input, shape index: {}]
  %s2 = inlined_call_operand.vmem [shape: f32[1,128], index: 2, kind: input, shape index: {}]
  %s3 = inlined_call_operand.hbm [shape: bf16[2048,128], index: 3, kind: output, shape index: {}]
  %s4 = sld [smem:[#allocation0]]
  $region45: #{_conv_im2col.1} parent=0
    _
  %s6 = ssub.s32 1, %s4
  %s7 = scalar_select 0, %s6, %s4
  $region1: #{_conv_im2col.1} parent=0
    #allocation2 [shape = 'u8[131072]{0}', space=vmem, size = 0x20000, scoped, tag = 'output window, operand 0']
    #allocation3 [shape = 's32[2]{0}', space=sflag, size = 0x8, scoped, tag = 'scoped memory for _conv_im2col.1']
    %8 = vsyncpa [#allocation3], 0
    %s9 = scalar_lea.sflag [#allocation3], 1
    %10 = vsyncpa %s9, 0
    loop: start=0, step=1, limit=10
    $region2: #{_conv_im2col.1} parent=1 // loop_pre_header
      _
    $region3: #{_conv_im2col.1} parent=1 // loop_header
      %s12 = sphi 0, %s16
      %p13 = scmp.ge.s32.totalorder %s12, 10
      %s19 = sphi 0, %s38
      %s20 = sphi 0, %s34
      %s21 = sphi 0, %s30
      %s22 = sphi 0, %s19
      %s23 = sphi 0, %s20
      %s24 = sphi 0, %s21
      %s25 = sphi 0, %s22
      %s26 = sphi 0, %s23
      %s27 = sphi 0, %s24
      %s43 = sphi 0, %s45
      %s46 = sphi 0, %s43
      %s47 = sphi 0, %s46
      %s63 = sphi 0, %s47
      %s71 = sphi 0, %s73
      %s74 = sphi 0, %s71
      %s75 = sphi 0, %s74
      %s91 = sphi 0, %s75
      %s97 = sphi 0, %s99
      %s100 = sphi 0, %s97
      %s101 = sphi 0, %s100
      %s117 = sphi 0, %s101
      %s125 = sphi 0, %s127
      %s128 = sphi 0, %s125
      %s129 = sphi 0, %s128
      %s145 = sphi 0, %s129
    $region4: #{_conv_im2col.1} parent=1 // loop_header_branch
      %15 = sbr.rel (%p13) target = $region8
    $region5: #{_conv_im2col.1} parent=1 // loop_body
      %s17 = ssub.s32 %s12, 1
      %s18 = ssub.s32 %s12, 2
      %s28 = sadd.s32 1, %s21
      %p29 = scmp.ge.s32.totalorder %s28, 1
      %s30 = scalar_select %p29, 0, %s28
      %s31 = sadd.s32 1, %s20
      %s32 = scalar_select %p29, %s31, %s20
      %p33 = scmp.ge.s32.totalorder %s32, 1
      %s34 = scalar_select %p33, 0, %s32
      %s35 = sadd.s32 1, %s19
      %s36 = scalar_select %p33, %s35, %s19
      %p37 = scmp.ge.s32.totalorder %s36, 8
      %s38 = scalar_select %p37, 0, %s36
      %s39 = ssub.s32 %s19, %s38
      %s40 = ssub.s32 %s21, %s30
      %s41 = sor.u32 %s39, %s40
      %p42 = scmp.eq.s32.totalorder %s41, 0
      %s44 = sadd.s32 %s43, 1
      %s45 = scalar_select %p42, %s43, %s44
      %p48 = pneg %p42
      %p49 = scmp.eq.s32.totalorder %s12, 7
      %p50 = por %p48, %p49
      %p51 = scmp.ne.s32.totalorder %s43, %s46
      %p52 = scmp.eq.s32.totalorder %s12, 0
      %p53 = por %p51, %p52
      %p54 = scmp.ne.s32.totalorder %s43, %s46
      %p55 = scmp.eq.s32.totalorder %s17, 7
      %p56 = por %p54, %p55
      %p57 = scmp.ne.s32.totalorder %s46, %s47
      %p58 = scmp.eq.s32.totalorder %s17, 0
      %p59 = por %p57, %p58
      %p60 = scmp.ne.s32.totalorder %s46, %s47
      %p61 = scmp.eq.s32.totalorder %s18, 7
      %p62 = por %p60, %p61
      %p64 = scmp.ne.s32.totalorder %s47, %s63
      %p65 = scmp.eq.s32.totalorder %s18, 0
      %p66 = por %p64, %p65
      %s67 = ssub.s32 %s21, %s30
      %s68 = ssub.s32 %s20, %s34
      %s69 = sor.u32 %s67, %s68
      %p70 = scmp.eq.s32.totalorder %s69, 0
      %s72 = sadd.s32 %s71, 1
      %s73 = scalar_select %p70, %s71, %s72
      %p76 = pneg %p70
      %p77 = scmp.eq.s32.totalorder %s12, 7
      %p78 = por %p76, %p77
      %p79 = scmp.ne.s32.totalorder %s71, %s74
      %p80 = scmp.eq.s32.totalorder %s12, 0
      %p81 = por %p79, %p80
      %p82 = scmp.ne.s32.totalorder %s71, %s74
      %p83 = scmp.eq.s32.totalorder %s17, 7
      %p84 = por %p82, %p83
      %p85 = scmp.ne.s32.totalorder %s74, %s75
      %p86 = scmp.eq.s32.totalorder %s17, 0
      %p87 = por %p85, %p86
      %p88 = scmp.ne.s32.totalorder %s74, %s75
      %p89 = scmp.eq.s32.totalorder %s18, 7
      %p90 = por %p88, %p89
      %p92 = scmp.ne.s32.totalorder %s75, %s91
      %p93 = scmp.eq.s32.totalorder %s18, 0
      %p94 = por %p92, %p93
      %s95 = ssub.s32 %s20, %s34
      %p96 = scmp.eq.s32.totalorder %s95, 0
      %s98 = sadd.s32 %s97, 1
      %s99 = scalar_select %p96, %s97, %s98
      %p102 = pneg %p96
      %p103 = scmp.eq.s32.totalorder %s12, 7
      %p104 = por %p102, %p103
      %p105 = scmp.ne.s32.totalorder %s97, %s100
      %p106 = scmp.eq.s32.totalorder %s12, 0
      %p107 = por %p105, %p106
      %p108 = scmp.ne.s32.totalorder %s97, %s100
      %p109 = scmp.eq.s32.totalorder %s17, 7
      %p110 = por %p108, %p109
      %p111 = scmp.ne.s32.totalorder %s100, %s101
      %p112 = scmp.eq.s32.totalorder %s17, 0
      %p113 = por %p111, %p112
      %p114 = scmp.ne.s32.totalorder %s100, %s101
      %p115 = scmp.eq.s32.totalorder %s18, 7
      %p116 = por %p114, %p115
      %p118 = scmp.ne.s32.totalorder %s101, %s117
      %p119 = scmp.eq.s32.totalorder %s18, 0
      %p120 = por %p118, %p119
      %s121 = ssub.s32 %s19, %s38
      %s122 = ssub.s32 %s20, %s34
      %s123 = sor.u32 %s121, %s122
      %p124 = scmp.eq.s32.totalorder %s123, 0
      %s126 = sadd.s32 %s125, 1
      %s127 = scalar_select %p124, %s125, %s126
      %p130 = pneg %p124
      %p131 = scmp.eq.s32.totalorder %s12, 7
      %p132 = por %p130, %p131
      %p133 = scmp.ne.s32.totalorder %s125, %s128
      %p134 = scmp.eq.s32.totalorder %s12, 0
      %p135 = por %p133, %p134
      %p136 = scmp.ne.s32.totalorder %s125, %s128
      %p137 = scmp.eq.s32.totalorder %s17, 7
      %p138 = por %p136, %p137
      %p139 = scmp.ne.s32.totalorder %s128, %s129
      %p140 = scmp.eq.s32.totalorder %s17, 0
      %p141 = por %p139, %p140
      %p142 = scmp.ne.s32.totalorder %s128, %s129
      %p143 = scmp.eq.s32.totalorder %s18, 7
      %p144 = por %p142, %p143
      %p146 = scmp.ne.s32.totalorder %s129, %s145
      %p147 = scmp.eq.s32.totalorder %s18, 0
      %p148 = por %p146, %p147
      %p149 = scmp.le.s32.totalorder 1, %s12
      %p150 = scmp.lt.s32.totalorder %s12, 9
      %p151 = pnand %p149, %p150
      %p152 = pneg %p151
      // Predicated region
      $region9: #{_conv_im2col.1} parent=5 // pred_check
        _
      $region10: #{_conv_im2col.1} parent=5 // pred_check_branch
        %154 = sbr.rel (%p151) target = $region12
      $region11: #{_conv_im2col.1} parent=5 // pred_region
        %s155 = ssub.s32 %s12, 1
        // Predicated region
        $region13: #{_conv_im2col.1} parent=11 // pred_check
          %p156 = pneg %p87
        $region14: #{_conv_im2col.1} parent=11 // pred_check_branch
          %158 = sbr.rel (%p156) target = $region16
        $region15: #{_conv_im2col.1} parent=11 // pred_region
          %s159 = smul.u32 32, %s24
          %p160 = scmp.lt.s32.totalorder %s159, 31
          %s161 = scalar_select %p160, %s159, 31
          %p162 = scmp.lt.s32.totalorder %s23, 0
          %s163 = scalar_select %p162, %s23, 0
          %s164 = sadd.s32 %s163, %s161
          %s165 = smul.addr %s164, 4
          %s166 = scalar_lea.vmem %s1, %s165
          %s167 = smul.u32 32, %s24
        $region16: #{_conv_im2col.1} parent=11 // pred_fallthru
          _
        // Predicated region
        $region17: #{_conv_im2col.1} parent=11 // pred_check
          %p168 = pneg %p113
        $region18: #{_conv_im2col.1} parent=11 // pred_check_branch
          %170 = sbr.rel (%p168) target = $region20
        $region19: #{_conv_im2col.1} parent=11 // pred_region
          %p171 = scmp.lt.s32.totalorder %s23, 0
          %s172 = scalar_select %p171, %s23, 0
          %s173 = scalar_lea.vmem %s2, %s172
        $region20: #{_conv_im2col.1} parent=11 // pred_fallthru
          _
      $region12: #{_conv_im2col.1} parent=5 // pred_fallthru
        _
      %p174 = scmp.lt.s32.totalorder %s12, 8
      // Predicated region
      $region21: #{_conv_im2col.1} parent=5 // pred_check
        %p175 = pneg %p174
      $region22: #{_conv_im2col.1} parent=5 // pred_check_branch
        %177 = sbr.rel (%p175) target = $region24
      $region23: #{_conv_im2col.1} parent=5 // pred_region
        // Predicated region
        $region25: #{_conv_im2col.1} parent=23 // pred_check
          %p178 = pneg %p53
        $region26: #{_conv_im2col.1} parent=23 // pred_check_branch
          %180 = sbr.rel (%p178) target = $region28
        $region27: #{_conv_im2col.1} parent=23 // pred_region
          %s181 = smul.u32 32, %s19
          %s182 = smul.u32 2, %s21
          %p183 = scmp.lt.s32.totalorder %s181, 255
          %s184 = scalar_select %p183, %s181, 255
          %p185 = scmp.lt.s32.totalorder %s182, 1
          %s186 = scalar_select %p185, %s182, 1
          %s187 = smul.addr %s184, 2
          %s188 = sadd.s32 %s186, %s187
          %s189 = smul.addr %s188, 4
          %s190 = scalar_lea.vmem %s0, %s189
          %s191 = smul.u32 32, %s19
          %s192 = smul.u32 2, %s21
        $region28: #{_conv_im2col.1} parent=23 // pred_fallthru
          _
      $region24: #{_conv_im2col.1} parent=5 // pred_fallthru
        _
      %p193 = scmp.le.s32.totalorder 1, %s12
      %p194 = scmp.lt.s32.totalorder %s12, 9
      %p195 = pnand %p193, %p194
      %p196 = pneg %p195
      // Predicated region
      $region29: #{_conv_im2col.1} parent=5 // pred_check
        _
      $region30: #{_conv_im2col.1} parent=5 // pred_check_branch
        %198 = sbr.rel (%p195) target = $region32
      $region31: #{_conv_im2col.1} parent=5 // pred_region
        %s199 = ssub.s32 %s12, 1
        %s200 = smul.u32 32, %s22
        %s201 = smul.u32 2, %s24
        %p202 = scmp.lt.s32.totalorder %s200, 255
        %s203 = scalar_select %p202, %s200, 255
        %p204 = scmp.lt.s32.totalorder %s201, 1
        %s205 = scalar_select %p204, %s201, 1
        %s206 = smul.addr %s203, 2
        %s207 = sadd.s32 %s205, %s206
        %s208 = smul.addr %s207, 4
        %s209 = scalar_lea.vmem %s0, %s208
        %p210 = pneg %p59
        %p211 = pneg %p56
        %s212 = smul.u32 32, %s24
        %p213 = scmp.lt.s32.totalorder %s212, 31
        %s214 = scalar_select %p213, %s212, 31
        %p215 = scmp.lt.s32.totalorder %s23, 0
        %s216 = scalar_select %p215, %s23, 0
        %s217 = sadd.s32 %s216, %s214
        %s218 = smul.addr %s217, 4
        %s219 = scalar_lea.vmem %s1, %s218
        %p220 = pneg %p87
        %p221 = pneg %p84
        %p222 = scmp.lt.s32.totalorder %s23, 0
        %s223 = scalar_select %p222, %s23, 0
        %s224 = scalar_lea.vmem %s2, %s223
        %p225 = pneg %p113
        %p226 = pneg %p110
        %p227 = pneg %p141
        %p228 = pneg %p138
        %s229 = sand.u32 %s128, 1
        %s230 = scalar_lea.sflag [#allocation3], %s229
        %s231 = sand.u32 %s128, 1
        %s232 = smul.addr %s231, 128
        %s233 = scalar_lea.vmem [#allocation2], %s232
        %s234 = smul.u32 32, %s22
        %s235 = smul.u32 2, %s24
        %p236 = scmp.lt.s32.totalorder %s234, 255
        %s237 = scalar_select %p236, %s234, 255
        %p238 = scmp.lt.s32.totalorder %s235, 1
        %s239 = scalar_select %p238, %s235, 1
        %s240 = smul.addr %s237, 2
        %s241 = sadd.s32 %s239, %s240
        %s242 = smul.addr %s241, 4
        %s243 = scalar_lea.vmem %s0, %s242
        %s244 = smul.u32 32, %s22
        %s245 = smul.u32 2, %s24
        %s246 = smul.u32 32, %s24
        %p247 = scmp.lt.s32.totalorder %s246, 31
        %s248 = scalar_select %p247, %s246, 31
        %p249 = scmp.lt.s32.totalorder %s23, 0
        %s250 = scalar_select %p249, %s23, 0
        %s251 = sadd.s32 %s250, %s248
        %s252 = smul.addr %s251, 4
        %s253 = scalar_lea.vmem %s1, %s252
        %s254 = smul.u32 32, %s24
        %p255 = scmp.lt.s32.totalorder %s23, 0
        %s256 = scalar_select %p255, %s23, 0
        %s257 = scalar_lea.vmem %s2, %s256
        %s258 = smul.u32 32, %s22
        %v260 = vld [vmem:[%s243] sm:$0xff]
        %v261 = vld [vmem:[%s243 + $0x8] sm:$0xff]
        %v262 = vld [vmem:[%s243 + $0x10] sm:$0xff]
        %v263 = vld [vmem:[%s243 + $0x18] sm:$0xff]
        %v264 = vld [vmem:[%s243 + $0x20] sm:$0xff]
        %v265 = vld [vmem:[%s243 + $0x28] sm:$0xff]
        %v266 = vld [vmem:[%s243 + $0x30] sm:$0xff]
        %v267 = vld [vmem:[%s243 + $0x38] sm:$0xff]
        %v268 = vld [vmem:[%s243 + $0x40] sm:$0xff]
        %v269 = vld [vmem:[%s243 + $0x48] sm:$0xff]
        %v270 = vld [vmem:[%s243 + $0x50] sm:$0xff]
        %v271 = vld [vmem:[%s243 + $0x58] sm:$0xff]
        %v272 = vld [vmem:[%s243 + $0x60] sm:$0xff]
        %v273 = vld [vmem:[%s243 + $0x68] sm:$0xff]
        %v274 = vld [vmem:[%s243 + $0x70] sm:$0xff]
        %v275 = vld [vmem:[%s243 + $0x78] sm:$0xff]
        %v276 = vld [vmem:[%s243 + $0x80] sm:$0xff]
        %v277 = vld [vmem:[%s243 + $0x88] sm:$0xff]
        %v278 = vld [vmem:[%s243 + $0x90] sm:$0xff]
        %v279 = vld [vmem:[%s243 + $0x98] sm:$0xff]
        %v280 = vld [vmem:[%s243 + $0xa0] sm:$0xff]
        %v281 = vld [vmem:[%s243 + $0xa8] sm:$0xff]
        %v282 = vld [vmem:[%s243 + $0xb0] sm:$0xff]
        %v283 = vld [vmem:[%s243 + $0xb8] sm:$0xff]
        %v284 = vld [vmem:[%s243 + $0xc0] sm:$0xff]
        %v285 = vld [vmem:[%s243 + $0xc8] sm:$0xff]
        %v286 = vld [vmem:[%s243 + $0xd0] sm:$0xff]
        %v287 = vld [vmem:[%s243 + $0xd8] sm:$0xff]
        %v288 = vld [vmem:[%s243 + $0xe0] sm:$0xff]
        %v289 = vld [vmem:[%s243 + $0xe8] sm:$0xff]
        %v290 = vld [vmem:[%s243 + $0xf0] sm:$0xff]
        %v291 = vld [vmem:[%s243 + $0xf8] sm:$0xff]
        %v292 = vld [vmem:[%s253] sm:$0xf]
        %v293 = vld [vmem:[%s253 + $0x4] sm:$0xf]
        %v294 = vld [vmem:[%s253 + $0x8] sm:$0xf]
        %v295 = vld [vmem:[%s253 + $0xc] sm:$0xf]
        %v296 = vld [vmem:[%s253 + $0x10] sm:$0xf]
        %v297 = vld [vmem:[%s253 + $0x14] sm:$0xf]
        %v298 = vld [vmem:[%s253 + $0x18] sm:$0xf]
        %v299 = vld [vmem:[%s253 + $0x1c] sm:$0xf]
        %v300 = vld [vmem:[%s253 + $0x20] sm:$0xf]
        %v301 = vld [vmem:[%s253 + $0x24] sm:$0xf]
        %v302 = vld [vmem:[%s253 + $0x28] sm:$0xf]
        %v303 = vld [vmem:[%s253 + $0x2c] sm:$0xf]
        %v304 = vld [vmem:[%s253 + $0x30] sm:$0xf]
        %v305 = vld [vmem:[%s253 + $0x34] sm:$0xf]
        %v306 = vld [vmem:[%s253 + $0x38] sm:$0xf]
        %v307 = vld [vmem:[%s253 + $0x3c] sm:$0xf]
        %v308 = vld [vmem:[%s253 + $0x40] sm:$0xf]
        %v309 = vld [vmem:[%s253 + $0x44] sm:$0xf]
        %v310 = vld [vmem:[%s253 + $0x48] sm:$0xf]
        %v311 = vld [vmem:[%s253 + $0x4c] sm:$0xf]
        %v312 = vld [vmem:[%s253 + $0x50] sm:$0xf]
        %v313 = vld [vmem:[%s253 + $0x54] sm:$0xf]
        %v314 = vld [vmem:[%s253 + $0x58] sm:$0xf]
        %v315 = vld [vmem:[%s253 + $0x5c] sm:$0xf]
        %v316 = vld [vmem:[%s253 + $0x60] sm:$0xf]
        %v317 = vld [vmem:[%s253 + $0x64] sm:$0xf]
        %v318 = vld [vmem:[%s253 + $0x68] sm:$0xf]
        %v319 = vld [vmem:[%s253 + $0x6c] sm:$0xf]
        %v320 = vld [vmem:[%s253 + $0x70] sm:$0xf]
        %v321 = vld [vmem:[%s253 + $0x74] sm:$0xf]
        %v322 = vld [vmem:[%s253 + $0x78] sm:$0xf]
        %v323 = vld [vmem:[%s253 + $0x7c] sm:$0xf]
        %v324 = vld [vmem:[%s257] sm:$0x1]
        %v326 = vlaneseq
        %v327 = vshrl.u32 %v326, 7
        %v328 = vsub.s32 0, %v327
        %v329 = vrot.slane %v324, %v328
        %v363 = vunpack.c.l.b16 %v260
        %v364 = vunpack.c.h.b16 %v260
        %v365 = vunpack.c.l.b16 %v261
        %v366 = vunpack.c.h.b16 %v261
        %v367 = vunpack.c.l.b16 %v262
        %v368 = vunpack.c.h.b16 %v262
        %v369 = vunpack.c.l.b16 %v263
        %v370 = vunpack.c.h.b16 %v263
        %v371 = vunpack.c.l.b16 %v264
        %v372 = vunpack.c.h.b16 %v264
        %v373 = vunpack.c.l.b16 %v265
        %v374 = vunpack.c.h.b16 %v265
        %v375 = vunpack.c.l.b16 %v266
        %v376 = vunpack.c.h.b16 %v266
        %v377 = vunpack.c.l.b16 %v267
        %v378 = vunpack.c.h.b16 %v267
        %v379 = vunpack.c.l.b16 %v268
        %v380 = vunpack.c.h.b16 %v268
        %v381 = vunpack.c.l.b16 %v269
        %v382 = vunpack.c.h.b16 %v269
        %v383 = vunpack.c.l.b16 %v270
        %v384 = vunpack.c.h.b16 %v270
        %v385 = vunpack.c.l.b16 %v271
        %v386 = vunpack.c.h.b16 %v271
        %v387 = vunpack.c.l.b16 %v272
        %v388 = vunpack.c.h.b16 %v272
        %v389 = vunpack.c.l.b16 %v273
        %v390 = vunpack.c.h.b16 %v273
        %v391 = vunpack.c.l.b16 %v274
        %v392 = vunpack.c.h.b16 %v274
        %v393 = vunpack.c.l.b16 %v275
        %v394 = vunpack.c.h.b16 %v275
        %v395 = vunpack.c.l.b16 %v276
        %v396 = vunpack.c.h.b16 %v276
        %v397 = vunpack.c.l.b16 %v277
        %v398 = vunpack.c.h.b16 %v277
        %v399 = vunpack.c.l.b16 %v278
        %v400 = vunpack.c.h.b16 %v278
        %v401 = vunpack.c.l.b16 %v279
        %v402 = vunpack.c.h.b16 %v279
        %v403 = vunpack.c.l.b16 %v280
        %v404 = vunpack.c.h.b16 %v280
        %v405 = vunpack.c.l.b16 %v281
        %v406 = vunpack.c.h.b16 %v281
        %v407 = vunpack.c.l.b16 %v282
        %v408 = vunpack.c.h.b16 %v282
        %v409 = vunpack.c.l.b16 %v283
        %v410 = vunpack.c.h.b16 %v283
        %v411 = vunpack.c.l.b16 %v284
        %v412 = vunpack.c.h.b16 %v284
        %v413 = vunpack.c.l.b16 %v285
        %v414 = vunpack.c.h.b16 %v285
        %v415 = vunpack.c.l.b16 %v286
        %v416 = vunpack.c.h.b16 %v286
        %v417 = vunpack.c.l.b16 %v287
        %v418 = vunpack.c.h.b16 %v287
        %v419 = vunpack.c.l.b16 %v288
        %v420 = vunpack.c.h.b16 %v288
        %v421 = vunpack.c.l.b16 %v289
        %v422 = vunpack.c.h.b16 %v289
        %v423 = vunpack.c.l.b16 %v290
        %v424 = vunpack.c.h.b16 %v290
        %v425 = vunpack.c.l.b16 %v291
        %v426 = vunpack.c.h.b16 %v291
        %v427 = vpack.c.b16 %v365, %v363
        %v428 = vpack.c.b16 %v366, %v364
        %v429 = vpack.c.b16 %v369, %v367
        %v430 = vpack.c.b16 %v370, %v368
        %v431 = vpack.c.b16 %v373, %v371
        %v432 = vpack.c.b16 %v374, %v372
        %v433 = vpack.c.b16 %v377, %v375
        %v434 = vpack.c.b16 %v378, %v376
        %v435 = vpack.c.b16 %v381, %v379
        %v436 = vpack.c.b16 %v382, %v380
        %v437 = vpack.c.b16 %v385, %v383
        %v438 = vpack.c.b16 %v386, %v384
        %v439 = vpack.c.b16 %v389, %v387
        %v440 = vpack.c.b16 %v390, %v388
        %v441 = vpack.c.b16 %v393, %v391
        %v442 = vpack.c.b16 %v394, %v392
        %v443 = vpack.c.b16 %v397, %v395
        %v444 = vpack.c.b16 %v398, %v396
        %v445 = vpack.c.b16 %v401, %v399
        %v446 = vpack.c.b16 %v402, %v400
        %v447 = vpack.c.b16 %v405, %v403
        %v448 = vpack.c.b16 %v406, %v404
        %v449 = vpack.c.b16 %v409, %v407
        %v450 = vpack.c.b16 %v410, %v408
        %v451 = vpack.c.b16 %v413, %v411
        %v452 = vpack.c.b16 %v414, %v412
        %v453 = vpack.c.b16 %v417, %v415
        %v454 = vpack.c.b16 %v418, %v416
        %v455 = vpack.c.b16 %v421, %v419
        %v456 = vpack.c.b16 %v422, %v420
        %v457 = vpack.c.b16 %v425, %v423
        %v458 = vpack.c.b16 %v426, %v424
        %v523 = vunpack.c.l.b16 %v292
        %v524 = vunpack.c.l.b16 %v293
        %v525 = vunpack.c.l.b16 %v294
        %v526 = vunpack.c.l.b16 %v295
        %v527 = vunpack.c.l.b16 %v296
        %v528 = vunpack.c.l.b16 %v297
        %v529 = vunpack.c.l.b16 %v298
        %v530 = vunpack.c.l.b16 %v299
        %v531 = vunpack.c.l.b16 %v300
        %v532 = vunpack.c.l.b16 %v301
        %v533 = vunpack.c.l.b16 %v302
        %v534 = vunpack.c.l.b16 %v303
        %v535 = vunpack.c.l.b16 %v304
        %v536 = vunpack.c.l.b16 %v305
        %v537 = vunpack.c.l.b16 %v306
        %v538 = vunpack.c.l.b16 %v307
        %v539 = vunpack.c.l.b16 %v308
        %v540 = vunpack.c.l.b16 %v309
        %v541 = vunpack.c.l.b16 %v310
        %v542 = vunpack.c.l.b16 %v311
        %v543 = vunpack.c.l.b16 %v312
        %v544 = vunpack.c.l.b16 %v313
        %v545 = vunpack.c.l.b16 %v314
        %v546 = vunpack.c.l.b16 %v315
        %v547 = vunpack.c.l.b16 %v316
        %v548 = vunpack.c.l.b16 %v317
        %v549 = vunpack.c.l.b16 %v318
        %v550 = vunpack.c.l.b16 %v319
        %v551 = vunpack.c.l.b16 %v320
        %v552 = vunpack.c.l.b16 %v321
        %v553 = vunpack.c.l.b16 %v322
        %v554 = vunpack.c.l.b16 %v323
        %v555 = vpack.c.b16 %v524, %v523
        %v556 = vpack.c.b16 %v526, %v525
        %v557 = vpack.c.b16 %v528, %v527
        %v558 = vpack.c.b16 %v530, %v529
        %v559 = vpack.c.b16 %v532, %v531
        %v560 = vpack.c.b16 %v534, %v533
        %v561 = vpack.c.b16 %v536, %v535
        %v562 = vpack.c.b16 %v538, %v537
        %v563 = vpack.c.b16 %v540, %v539
        %v564 = vpack.c.b16 %v542, %v541
        %v565 = vpack.c.b16 %v544, %v543
        %v566 = vpack.c.b16 %v546, %v545
        %v567 = vpack.c.b16 %v548, %v547
        %v568 = vpack.c.b16 %v550, %v549
        %v569 = vpack.c.b16 %v552, %v551
        %v570 = vpack.c.b16 %v554, %v553
        %587 = vmatprep.subr.bf16.mxu0 0
        %588 = vmatpush1.bf16.msra.mxu0 %v555
        %589 = vmatprep.subr.bf16.mxu0 0
        %590 = vmatpush1.bf16.msra.mxu0 %v556
        %591 = vmatprep.subr.bf16.mxu0 0
        %592 = vmatpush1.bf16.msra.mxu0 %v557
        %593 = vmatprep.subr.bf16.mxu0 0
        %594 = vmatpush1.bf16.msra.mxu0 %v558
        %595 = vmatprep.subr.bf16.mxu0 0
        %596 = vmatpush1.bf16.msra.mxu0 %v559
        %597 = vmatprep.subr.bf16.mxu0 0
        %598 = vmatpush1.bf16.msra.mxu0 %v560
        %599 = vmatprep.subr.bf16.mxu0 0
        %600 = vmatpush1.bf16.msra.mxu0 %v561
        %601 = vmatprep.subr.bf16.mxu0 0
        %602 = vmatpush1.bf16.msra.mxu0 %v562
        %603 = vmatprep.subr.bf16.mxu0 0
        %604 = vmatpush1.bf16.msra.mxu0 %v563
        %605 = vmatprep.subr.bf16.mxu0 0
        %606 = vmatpush1.bf16.msra.mxu0 %v564
        %607 = vmatprep.subr.bf16.mxu0 0
        %608 = vmatpush1.bf16.msra.mxu0 %v565
        %609 = vmatprep.subr.bf16.mxu0 0
        %610 = vmatpush1.bf16.msra.mxu0 %v566
        %611 = vmatprep.subr.bf16.mxu0 0
        %612 = vmatpush1.bf16.msra.mxu0 %v567
        %613 = vmatprep.subr.bf16.mxu0 0
        %614 = vmatpush1.bf16.msra.mxu0 %v568
        %615 = vmatprep.subr.bf16.mxu0 0
        %616 = vmatpush1.bf16.msra.mxu0 %v569
        %617 = vmatprep.subr.bf16.mxu0 0
        %618 = vmatpush1.bf16.msra.mxu0 %v570
        %619 = vmatprep.mubr.bf16.mxu0 %v428
        %620 = vmatmul.mubr.bf16.gmra.mrb[0].mxu0 %v427
        %v621 = vpop.f32.mrb[0].mxu0
        %v622 = vadd.f32 %v329, %v621
        %v623 = vpop.f32.mrb[0].mxu0
        %v624 = vpop.f32.mrb[0].mxu0
        %v625 = vadd.f32 %v329, %v624
        %v626 = vpop.f32.mrb[0].mxu0
        %627 = vmatprep.mubr.bf16.mxu0 %v430
        %628 = vmatmul.mubr.bf16.gmra.mrb[0].mxu0 %v429
        %v629 = vpop.f32.mrb[0].mxu0
        %v630 = vadd.f32 %v329, %v629
        %v631 = vpop.f32.mrb[0].mxu0
        %v632 = vpop.f32.mrb[0].mxu0
        %v633 = vadd.f32 %v329, %v632
        %v634 = vpop.f32.mrb[0].mxu0
        %635 = vmatprep.mubr.bf16.mxu0 %v432
        %636 = vmatmul.mubr.bf16.gmra.mrb[0].mxu0 %v431
        %v637 = vpop.f32.mrb[0].mxu0
        %v638 = vadd.f32 %v329, %v637
        %v639 = vpop.f32.mrb[0].mxu0
        %v640 = vpop.f32.mrb[0].mxu0
        %v641 = vadd.f32 %v329, %v640
        %v642 = vpop.f32.mrb[0].mxu0
        %643 = vmatprep.mubr.bf16.mxu0 %v434
        %644 = vmatmul.mubr.bf16.gmra.mrb[0].mxu0 %v433
        %v645 = vpop.f32.mrb[0].mxu0
        %v646 = vadd.f32 %v329, %v645
        %v647 = vpop.f32.mrb[0].mxu0
        %v648 = vpop.f32.mrb[0].mxu0
        %v649 = vadd.f32 %v329, %v648
        %v650 = vpop.f32.mrb[0].mxu0
        %651 = vmatprep.mubr.bf16.mxu0 %v436
        %652 = vmatmul.mubr.bf16.gmra.mrb[0].mxu0 %v435
        %v653 = vpop.f32.mrb[0].mxu0
        %v654 = vadd.f32 %v329, %v653
        %v655 = vpop.f32.mrb[0].mxu0
        %v656 = vpop.f32.mrb[0].mxu0
        %v657 = vadd.f32 %v329, %v656
        %v658 = vpop.f32.mrb[0].mxu0
        %659 = vmatprep.mubr.bf16.mxu0 %v438
        %660 = vmatmul.mubr.bf16.gmra.mrb[0].mxu0 %v437
        %v661 = vpop.f32.mrb[0].mxu0
        %v662 = vadd.f32 %v329, %v661
        %v663 = vpop.f32.mrb[0].mxu0
        %v664 = vpop.f32.mrb[0].mxu0
        %v665 = vadd.f32 %v329, %v664
        %v666 = vpop.f32.mrb[0].mxu0
        %667 = vmatprep.mubr.bf16.mxu0 %v440
        %668 = vmatmul.mubr.bf16.gmra.mrb[0].mxu0 %v439
        %v669 = vpop.f32.mrb[0].mxu0
        %v670 = vadd.f32 %v329, %v669
        %v671 = vpop.f32.mrb[0].mxu0
        %v672 = vpop.f32.mrb[0].mxu0
        %v673 = vadd.f32 %v329, %v672
        %v674 = vpop.f32.mrb[0].mxu0
        %675 = vmatprep.mubr.bf16.mxu0 %v442
        %676 = vmatmul.mubr.bf16.gmra.mrb[0].mxu0 %v441
        %v677 = vpop.f32.mrb[0].mxu0
        %v678 = vadd.f32 %v329, %v677
        %v679 = vpop.f32.mrb[0].mxu0
        %v680 = vpop.f32.mrb[0].mxu0
        %v681 = vadd.f32 %v329, %v680
        %v682 = vpop.f32.mrb[0].mxu0
        %683 = vmatprep.mubr.bf16.mxu0 %v444
        %684 = vmatmul.mubr.bf16.gmra.mrb[0].mxu0 %v443
        %v685 = vpop.f32.mrb[0].mxu0
        %v686 = vadd.f32 %v329, %v685
        %v687 = vpop.f32.mrb[0].mxu0
        %v688 = vpop.f32.mrb[0].mxu0
        %v689 = vadd.f32 %v329, %v688
        %v690 = vpop.f32.mrb[0].mxu0
        %691 = vmatprep.mubr.bf16.mxu0 %v446
        %692 = vmatmul.mubr.bf16.gmra.mrb[0].mxu0 %v445
        %v693 = vpop.f32.mrb[0].mxu0
        %v694 = vadd.f32 %v329, %v693
        %v695 = vpop.f32.mrb[0].mxu0
        %v696 = vpop.f32.mrb[0].mxu0
        %v697 = vadd.f32 %v329, %v696
        %v698 = vpop.f32.mrb[0].mxu0
        %699 = vmatprep.mubr.bf16.mxu0 %v448
        %700 = vmatmul.mubr.bf16.gmra.mrb[0].mxu0 %v447
        %v701 = vpop.f32.mrb[0].mxu0
        %v702 = vadd.f32 %v329, %v701
        %v703 = vpop.f32.mrb[0].mxu0
        %v704 = vpop.f32.mrb[0].mxu0
        %v705 = vadd.f32 %v329, %v704
        %v706 = vpop.f32.mrb[0].mxu0
        %707 = vmatprep.mubr.bf16.mxu0 %v450
        %708 = vmatmul.mubr.bf16.gmra.mrb[0].mxu0 %v449
        %v709 = vpop.f32.mrb[0].mxu0
        %v710 = vadd.f32 %v329, %v709
        %v711 = vpop.f32.mrb[0].mxu0
        %v712 = vpop.f32.mrb[0].mxu0
        %v713 = vadd.f32 %v329, %v712
        %v714 = vpop.f32.mrb[0].mxu0
        %715 = vmatprep.mubr.bf16.mxu0 %v452
        %716 = vmatmul.mubr.bf16.gmra.mrb[0].mxu0 %v451
        %v717 = vpop.f32.mrb[0].mxu0
        %v718 = vadd.f32 %v329, %v717
        %v719 = vpop.f32.mrb[0].mxu0
        %v720 = vpop.f32.mrb[0].mxu0
        %v721 = vadd.f32 %v329, %v720
        %v722 = vpop.f32.mrb[0].mxu0
        %723 = vmatprep.mubr.bf16.mxu0 %v454
        %724 = vmatmul.mubr.bf16.gmra.mrb[0].mxu0 %v453
        %v725 = vpop.f32.mrb[0].mxu0
        %v726 = vadd.f32 %v329, %v725
        %v727 = vpop.f32.mrb[0].mxu0
        %v728 = vpop.f32.mrb[0].mxu0
        %v729 = vadd.f32 %v329, %v728
        %v730 = vpop.f32.mrb[0].mxu0
        %731 = vmatprep.mubr.bf16.mxu0 %v456
        %732 = vmatmul.mubr.bf16.gmra.mrb[0].mxu0 %v455
        %v733 = vpop.f32.mrb[0].mxu0
        %v734 = vadd.f32 %v329, %v733
        %v735 = vpop.f32.mrb[0].mxu0
        %v736 = vpop.f32.mrb[0].mxu0
        %v737 = vadd.f32 %v329, %v736
        %v738 = vpop.f32.mrb[0].mxu0
        %739 = vmatprep.mubr.bf16.mxu0 %v458
        %740 = vmatmul.mubr.bf16.gmra.mrb[0].mxu0 %v457
        %v741 = vpop.f32.mrb[0].mxu0
        %v742 = vadd.f32 %v329, %v741
        %v743 = vpop.f32.mrb[0].mxu0
        %v744 = vpop.f32.mrb[0].mxu0
        %v745 = vadd.f32 %v329, %v744
        %v746 = vpop.f32.mrb[0].mxu0
        %747 = vdwg.mxu0
        %v748 = vmax.f32 %v622, 0.0
        %v749 = vmax.f32 %v625, 0.0
        %v750 = vmax.f32 %v630, 0.0
        %v751 = vmax.f32 %v633, 0.0
        %v752 = vmax.f32 %v638, 0.0
        %v753 = vmax.f32 %v641, 0.0
        %v754 = vmax.f32 %v646, 0.0
        %v755 = vmax.f32 %v649, 0.0
        %v756 = vmax.f32 %v654, 0.0
        %v757 = vmax.f32 %v657, 0.0
        %v758 = vmax.f32 %v662, 0.0
        %v759 = vmax.f32 %v665, 0.0
        %v760 = vmax.f32 %v670, 0.0
        %v761 = vmax.f32 %v673, 0.0
        %v762 = vmax.f32 %v678, 0.0
        %v763 = vmax.f32 %v681, 0.0
        %v764 = vmax.f32 %v686, 0.0
        %v765 = vmax.f32 %v689, 0.0
        %v766 = vmax.f32 %v694, 0.0
        %v767 = vmax.f32 %v697, 0.0
        %v768 = vmax.f32 %v702, 0.0
        %v769 = vmax.f32 %v705, 0.0
        %v770 = vmax.f32 %v710, 0.0
        %v771 = vmax.f32 %v713, 0.0
        %v772 = vmax.f32 %v718, 0.0
        %v773 = vmax.f32 %v721, 0.0
        %v774 = vmax.f32 %v726, 0.0
        %v775 = vmax.f32 %v729, 0.0
        %v776 = vmax.f32 %v734, 0.0
        %v777 = vmax.f32 %v737, 0.0
        %v778 = vmax.f32 %v742, 0.0
        %v779 = vmax.f32 %v745, 0.0
        %v780 = vpack.c.bf16 %v749, %v748
        %v781 = vpack.c.bf16 %v751, %v750
        %v782 = vpack.c.bf16 %v753, %v752
        %v783 = vpack.c.bf16 %v755, %v754
        %v784 = vpack.c.bf16 %v757, %v756
        %v785 = vpack.c.bf16 %v759, %v758
        %v786 = vpack.c.bf16 %v761, %v760
        %v787 = vpack.c.bf16 %v763, %v762
        %v788 = vpack.c.bf16 %v765, %v764
        %v789 = vpack.c.bf16 %v767, %v766
        %v790 = vpack.c.bf16 %v769, %v768
        %v791 = vpack.c.bf16 %v771, %v770
        %v792 = vpack.c.bf16 %v773, %v772
        %v793 = vpack.c.bf16 %v775, %v774
        %v794 = vpack.c.bf16 %v777, %v776
        %v795 = vpack.c.bf16 %v779, %v778
        %v812 = vunpack.c.l.b16 %v780
        %v813 = vunpack.c.h.b16 %v780
        %v814 = vunpack.c.l.b16 %v781
        %v815 = vunpack.c.h.b16 %v781
        %v816 = vunpack.c.l.b16 %v782
        %v817 = vunpack.c.h.b16 %v782
        %v818 = vunpack.c.l.b16 %v783
        %v819 = vunpack.c.h.b16 %v783
        %v820 = vunpack.c.l.b16 %v784
        %v821 = vunpack.c.h.b16 %v784
        %v822 = vunpack.c.l.b16 %v785
        %v823 = vunpack.c.h.b16 %v785
        %v824 = vunpack.c.l.b16 %v786
        %v825 = vunpack.c.h.b16 %v786
        %v826 = vunpack.c.l.b16 %v787
        %v827 = vunpack.c.h.b16 %v787
        %v828 = vunpack.c.l.b16 %v788
        %v829 = vunpack.c.h.b16 %v788
        %v830 = vunpack.c.l.b16 %v789
        %v831 = vunpack.c.h.b16 %v789
        %v832 = vunpack.c.l.b16 %v790
        %v833 = vunpack.c.h.b16 %v790
        %v834 = vunpack.c.l.b16 %v791
        %v835 = vunpack.c.h.b16 %v791
        %v836 = vunpack.c.l.b16 %v792
        %v837 = vunpack.c.h.b16 %v792
        %v838 = vunpack.c.l.b16 %v793
        %v839 = vunpack.c.h.b16 %v793
        %v840 = vunpack.c.l.b16 %v794
        %v841 = vunpack.c.h.b16 %v794
        %v842 = vunpack.c.l.b16 %v795
        %v843 = vunpack.c.h.b16 %v795
        %v844 = vpack.c.b16 %v812, %v812
        %v845 = vpack.c.b16 %v813, %v813
        %v846 = vpack.c.b16 %v814, %v814
        %v847 = vpack.c.b16 %v815, %v815
        %v848 = vpack.c.b16 %v816, %v816
        %v849 = vpack.c.b16 %v817, %v817
        %v850 = vpack.c.b16 %v818, %v818
        %v851 = vpack.c.b16 %v819, %v819
        %v852 = vpack.c.b16 %v820, %v820
        %v853 = vpack.c.b16 %v821, %v821
        %v854 = vpack.c.b16 %v822, %v822
        %v855 = vpack.c.b16 %v823, %v823
        %v856 = vpack.c.b16 %v824, %v824
        %v857 = vpack.c.b16 %v825, %v825
        %v858 = vpack.c.b16 %v826, %v826
        %v859 = vpack.c.b16 %v827, %v827
        %v860 = vpack.c.b16 %v828, %v828
        %v861 = vpack.c.b16 %v829, %v829
        %v862 = vpack.c.b16 %v830, %v830
        %v863 = vpack.c.b16 %v831, %v831
        %v864 = vpack.c.b16 %v832, %v832
        %v865 = vpack.c.b16 %v833, %v833
        %v866 = vpack.c.b16 %v834, %v834
        %v867 = vpack.c.b16 %v835, %v835
        %v868 = vpack.c.b16 %v836, %v836
        %v869 = vpack.c.b16 %v837, %v837
        %v870 = vpack.c.b16 %v838, %v838
        %v871 = vpack.c.b16 %v839, %v839
        %v872 = vpack.c.b16 %v840, %v840
        %v873 = vpack.c.b16 %v841, %v841
        %v874 = vpack.c.b16 %v842, %v842
        %v875 = vpack.c.b16 %v843, %v843
        %908 = vst [vmem:[%s233] sm:$0xf] %v844
        %909 = vst [vmem:[%s233 + $0x4] sm:$0xf] %v845
        %910 = vst [vmem:[%s233 + $0x8] sm:$0xf] %v846
        %911 = vst [vmem:[%s233 + $0xc] sm:$0xf] %v847
        %912 = vst [vmem:[%s233 + $0x10] sm:$0xf] %v848
        %913 = vst [vmem:[%s233 + $0x14] sm:$0xf] %v849
        %914 = vst [vmem:[%s233 + $0x18] sm:$0xf] %v850
        %915 = vst [vmem:[%s233 + $0x1c] sm:$0xf] %v851
        %916 = vst [vmem:[%s233 + $0x20] sm:$0xf] %v852
        %917 = vst [vmem:[%s233 + $0x24] sm:$0xf] %v853
        %918 = vst [vmem:[%s233 + $0x28] sm:$0xf] %v854
        %919 = vst [vmem:[%s233 + $0x2c] sm:$0xf] %v855
        %920 = vst [vmem:[%s233 + $0x30] sm:$0xf] %v856
        %921 = vst [vmem:[%s233 + $0x34] sm:$0xf] %v857
        %922 = vst [vmem:[%s233 + $0x38] sm:$0xf] %v858
        %923 = vst [vmem:[%s233 + $0x3c] sm:$0xf] %v859
        %924 = vst [vmem:[%s233 + $0x40] sm:$0xf] %v860
        %925 = vst [vmem:[%s233 + $0x44] sm:$0xf] %v861
        %926 = vst [vmem:[%s233 + $0x48] sm:$0xf] %v862
        %927 = vst [vmem:[%s233 + $0x4c] sm:$0xf] %v863
        %928 = vst [vmem:[%s233 + $0x50] sm:$0xf] %v864
        %929 = vst [vmem:[%s233 + $0x54] sm:$0xf] %v865
        %930 = vst [vmem:[%s233 + $0x58] sm:$0xf] %v866
        %931 = vst [vmem:[%s233 + $0x5c] sm:$0xf] %v867
        %932 = vst [vmem:[%s233 + $0x60] sm:$0xf] %v868
        %933 = vst [vmem:[%s233 + $0x64] sm:$0xf] %v869
        %934 = vst [vmem:[%s233 + $0x68] sm:$0xf] %v870
        %935 = vst [vmem:[%s233 + $0x6c] sm:$0xf] %v871
        %936 = vst [vmem:[%s233 + $0x70] sm:$0xf] %v872
        %937 = vst [vmem:[%s233 + $0x74] sm:$0xf] %v873
        %938 = vst [vmem:[%s233 + $0x78] sm:$0xf] %v874
        %939 = vst [vmem:[%s233 + $0x7c] sm:$0xf] %v875
        %s940 = sand.u32 %s128, 1
        %s941 = scalar_lea.sflag [#allocation3], %s940
        %s942 = sand.u32 %s128, 1
        %s943 = smul.addr %s942, 128
        %s944 = scalar_lea.vmem [#allocation2], %s943
        // Predicated region
        $region33: #{_conv_im2col.1} parent=31 // pred_check
          %p945 = pneg %p138
        $region34: #{_conv_im2col.1} parent=31 // pred_check_branch
          %947 = sbr.rel (%p945) target = $region36
        $region35: #{_conv_im2col.1} parent=31 // pred_region
          %s948 = smul.u32 32, %s22
          %s950 = ssub.s32 2048, 2048
          %951 = vsyncadd %s941, %s950
          %s952 = sadd.s32 %s23, %s948
          %s953 = smul.addr %s952, 64
          %s954 = scalar_lea.hbm %s3, %s953
          %s955 = sshll.u32 %s944, 4
          %s956 = int_to_ptr.vmem [resolvable:$true] %s955
          %961 = dma.vmem_to_hbm [thread:$0]  %s956, 2048, %s954, %s941, 64, 64, 4
        $region36: #{_conv_im2col.1} parent=31 // pred_fallthru
          _
      $region32: #{_conv_im2col.1} parent=5 // pred_fallthru
        _
      %p962 = scmp.le.s32.totalorder 2, %s12
      // Predicated region
      $region37: #{_conv_im2col.1} parent=5 // pred_check
        %p963 = pneg %p962
      $region38: #{_conv_im2col.1} parent=5 // pred_check_branch
        %965 = sbr.rel (%p963) target = $region40
      $region39: #{_conv_im2col.1} parent=5 // pred_region
        %s966 = ssub.s32 %s12, 2
        // Predicated region
        $region41: #{_conv_im2col.1} parent=39 // pred_check
          %p967 = pneg %p144
        $region42: #{_conv_im2col.1} parent=39 // pred_check_branch
          %969 = sbr.rel (%p967) target = $region44
        $region43: #{_conv_im2col.1} parent=39 // pred_region
          %s970 = sand.u32 %s129, 1
          %s971 = scalar_lea.sflag [#allocation3], %s970
          %s972 = sand.u32 %s129, 1
          %s973 = smul.addr %s972, 128
          %s974 = scalar_lea.vmem [#allocation2], %s973
          %975 = dma.done %s971, 2048
        $region44: #{_conv_im2col.1} parent=39 // pred_fallthru
          _
      $region40: #{_conv_im2col.1} parent=5 // pred_fallthru
        _
    $region6: #{_conv_im2col.1} parent=1 // loop_footer
      %s16 = sadd.s32 1, %s12
    $region7: #{_conv_im2col.1} parent=1 // loop_footer_branch
      %11 = sbr.rel target = $region3
    $region8: #{_conv_im2col.1} parent=1 // loop_exit
      _
    %976 = vsyncpa [#allocation3], 1
    %s977 = scalar_lea.sflag [#allocation3], 1
    %978 = vsyncpa %s977, 1

</llo_original>
